<compile_context>
chip_gen: v5e
topology: v5e:2x2
jax: 0.10.0
libtpu: 0.0.40
codegen_flags: <defaults>
</compile_context>

<pallas_src>
import functools

import jax
import jax.numpy as jnp
from jax.experimental import pallas as pl
from jax.experimental.pallas import tpu as pltpu


def gtu_kernel(x_ref, w_ref, b_ref, o_ref, *, C, K, lane_chunk):
    # x_ref: (C, W, TM)      VMEM  input block; lanes = TM (tile of B*H)
    # w_ref: (2*C*C*K,)      SMEM  Conv2d weight, flattened [out_ch, in_ch, k]
    # b_ref: (2*C,)          SMEM  Conv2d bias (both halves)
    # o_ref: (C, W_out, TM)  VMEM  gated output block
    W_out = o_ref.shape[1]
    TM = o_ref.shape[2]

    # Static lane-chunk loop: keeps the 2C live f32 accumulators inside the
    # vreg file even when the DMA block (TM) is large.
    for c0 in range(0, TM, lane_chunk):
        cs = min(lane_chunk, TM - c0)

        # Bias folded into the accumulator init (saves a VALU add per element).
        acc = [jnp.full((W_out, cs), b_ref[oc], jnp.float32) for oc in range(2 * C)]

        # Each shifted conv tap is sliced once and reused for all 2C outputs.
        for ci in range(C):
            for k in range(K):
                # Shifted window straight from the resident VMEM block
                # (sublane offset k; always in-bounds since k + W_out <= W).
                x_s = x_ref[ci, k:k + W_out, c0:c0 + cs].astype(jnp.float32)
                for oc in range(2 * C):
                    acc[oc] = acc[oc] + w_ref[(oc * C + ci) * K + k] * x_s

        for co in range(C):
            p = jnp.tanh(acc[co])
            # sigmoid(x) == 0.5 * (1 + tanh(x/2)); keeps the gate on the EUP.
            q = 0.5 * jnp.tanh(0.5 * acc[C + co]) + 0.5
            o_ref[co, :, c0:c0 + cs] = (p * q).astype(o_ref.dtype)


def gtu_forward(x_nchw, weight, bias, kernel_size, *, tile_m=None, lane_chunk=None):
    """x_nchw: [B, C, H, W]; weight: [2C, C, 1, K]; bias: [2C] -> [B, C, H, W-K+1]."""
    B, C, H, W = x_nchw.shape
    K = int(kernel_size)
    W_out = W - K + 1
    M = B * H
    out_dtype = x_nchw.dtype

    # ---- tiling ----------------------------------------------------------
    sub_tiles = -(-W_out // 8)            # sublane tiles per (W_out, 128) accumulator
    if lane_chunk is None:
        # Keep 2C live f32 accumulators of (W_out, lane_chunk) within ~32 vregs.
        lane_chunk = 128 * max(1, 32 // max(1, 2 * C * sub_tiles))
    lane_chunk = max(128, int(lane_chunk))

    if tile_m is None:
        in_b = jnp.dtype(x_nchw.dtype).itemsize
        out_b = jnp.dtype(out_dtype).itemsize
        # Double-buffered input + output blocks, bytes per lane column.
        bytes_per_lane = 2 * C * (W * in_b + W_out * out_b)
        vmem_budget = 24 * 1024 * 1024            # conservative on v5e/v6e/v7x
        cap = max(lane_chunk, vmem_budget // bytes_per_lane)
        cap = min(cap, 8 * lane_chunk)            # bound the static chunk unroll
        cap = max(lane_chunk, (cap // lane_chunk) * lane_chunk)
        if M > cap:
            tile_m = cap
        else:
            tile_m = M
            if M >= 2 * lane_chunk:
                # >= 2 grid steps so v7x's two TensorCores both get work.
                half = pl.cdiv(pl.cdiv(M, 2), lane_chunk) * lane_chunk
                tile_m = min(half, cap)
    grid_m = pl.cdiv(M, tile_m)

    # Layout plumbing only (no K-duplicated im2col): NCHW -> [C, W, B*H].
    x_cwm = jnp.transpose(x_nchw, (1, 3, 0, 2)).reshape(C, W, M)

    # Conv params flattened for SMEM scalar access: index = (oc*C + ci)*K + k.
    w_flat = weight.reshape(2 * C * C * K).astype(jnp.float32)
    b_flat = bias.reshape(2 * C).astype(jnp.float32)

    kernel = functools.partial(gtu_kernel, C=C, K=K, lane_chunk=lane_chunk)

    out_cwm = pl.pallas_call(
        kernel,
        out_shape=jax.ShapeDtypeStruct((C, W_out, M), out_dtype),
        grid_spec=pl.GridSpec(
            grid=(grid_m,),
            in_specs=[
                pl.BlockSpec((C, W, tile_m), lambda i: (0, 0, i)),
                pl.BlockSpec(memory_space=pltpu.MemorySpace.SMEM),
                pl.BlockSpec(memory_space=pltpu.MemorySpace.SMEM),
            ],
            out_specs=pl.BlockSpec((C, W_out, tile_m), lambda i: (0, 0, i)),
        ),
        compiler_params=pltpu.CompilerParams(
            dimension_semantics=("parallel",),
            vmem_limit_bytes=32 * 1024 * 1024,
        ),
    )(x_cwm, w_flat, b_flat)

    # [C, W_out, B*H] -> [B, C, H, W_out]
    out = out_cwm.reshape(C, W_out, B, H)
    return jnp.transpose(out, (2, 0, 3, 1))


def gtu_reference(x_nchw, weight, bias, kernel_size):
    """Pure-JAX reference matching the PyTorch module."""
    B, C, H, W = x_nchw.shape
    K = kernel_size
    W_out = W - K + 1
    taps = jnp.stack([x_nchw[:, :, :, k:k + W_out] for k in range(K)], axis=-1)  # [B,C,H,W_out,K]
    y = jnp.einsum("bchwk,ock->bohw", taps, weight[:, :, 0, :]) + bias[None, :, None, None]
    x_p = y[:, :C]
    x_q = y[:, C:]
    return jnp.tanh(x_p) * jax.nn.sigmoid(x_q)


if __name__ == "__main__":
    B, C, H, W = 2, 4, 16, 16
    K = 3

    key = jax.random.PRNGKey(0)
    kx, kw, kb = jax.random.split(key, 3)
    x = jax.random.normal(kx, (B, C, H, W), dtype=jnp.float32)
    # Conv2d(in=C, out=2C, kernel=(1,K)) parameters, deterministic init
    weight = jax.random.normal(kw, (2 * C, C, 1, K), dtype=jnp.float32) * 0.1
    bias = jax.random.normal(kb, (2 * C,), dtype=jnp.float32) * 0.1

    out = gtu_forward(x, weight, bias, K)
    out = jax.block_until_ready(out)

    ref = gtu_reference(x, weight, bias, K)
    assert out.shape == (B, C, H, W - K + 1)
    assert jnp.allclose(out, ref, atol=1e-5, rtol=1e-5)

    print("KERNEL_OK")
</pallas_src>

<mosaic_0001>
module attributes {stable_mosaic.version = 11 : i64} {
  func.func @gtu_kernel(%arg0: i32, %arg1: memref<4x16x32xf32, #tpu.memory_space<vmem>>, %arg2: memref<96xf32, #tpu.memory_space<smem>>, %arg3: memref<8xf32, #tpu.memory_space<smem>>, %arg4: memref<4x14x32xf32, #tpu.memory_space<vmem>>) attributes {dimension_semantics = [#tpu.dimension_semantics<parallel>], iteration_bounds = array<i64: 1>, scalar_prefetch = 0 : i64, scratch_operands = 0 : i64, tpu.core_type = #tpu.core_type<tc>, window_params = [{transform_indices = @transform_0, window_bounds = array<i64: 4, 16, 32>}, {transform_indices = @transform_1, window_bounds = array<i64: 96>}, {transform_indices = @transform_2, window_bounds = array<i64: 8>}, {transform_indices = @transform_3, window_bounds = array<i64: 4, 14, 32>}]} {
    %c0 = arith.constant 0 : index
    %0 = memref.load %arg3[%c0] : memref<8xf32, #tpu.memory_space<smem>>
    %1 = vector.broadcast %0 : f32 to vector<14x32xf32>
    %c1 = arith.constant 1 : index
    %2 = memref.load %arg3[%c1] : memref<8xf32, #tpu.memory_space<smem>>
    %3 = vector.broadcast %2 : f32 to vector<14x32xf32>
    %c2 = arith.constant 2 : index
    %4 = memref.load %arg3[%c2] : memref<8xf32, #tpu.memory_space<smem>>
    %5 = vector.broadcast %4 : f32 to vector<14x32xf32>
    %c3 = arith.constant 3 : index
    %6 = memref.load %arg3[%c3] : memref<8xf32, #tpu.memory_space<smem>>
    %7 = vector.broadcast %6 : f32 to vector<14x32xf32>
    %c4 = arith.constant 4 : index
    %8 = memref.load %arg3[%c4] : memref<8xf32, #tpu.memory_space<smem>>
    %9 = vector.broadcast %8 : f32 to vector<14x32xf32>
    %c5 = arith.constant 5 : index
    %10 = memref.load %arg3[%c5] : memref<8xf32, #tpu.memory_space<smem>>
    %11 = vector.broadcast %10 : f32 to vector<14x32xf32>
    %c6 = arith.constant 6 : index
    %12 = memref.load %arg3[%c6] : memref<8xf32, #tpu.memory_space<smem>>
    %13 = vector.broadcast %12 : f32 to vector<14x32xf32>
    %c7 = arith.constant 7 : index
    %14 = memref.load %arg3[%c7] : memref<8xf32, #tpu.memory_space<smem>>
    %15 = vector.broadcast %14 : f32 to vector<14x32xf32>
    %c0_0 = arith.constant 0 : index
    %c0_1 = arith.constant 0 : index
    %c0_2 = arith.constant 0 : index
    %16 = vector.load %arg1[%c0_0, %c0_1, %c0_2] : memref<4x16x32xf32, #tpu.memory_space<vmem>>, vector<1x14x32xf32>
    %17 = vector.shape_cast %16 : vector<1x14x32xf32> to vector<14x32xf32>
    %c0_3 = arith.constant 0 : index
    %18 = memref.load %arg2[%c0_3] : memref<96xf32, #tpu.memory_space<smem>>
    %19 = vector.broadcast %18 : f32 to vector<14x32xf32>
    %20 = arith.mulf %19, %17 : vector<14x32xf32>
    %21 = arith.addf %1, %20 : vector<14x32xf32>
    %c12 = arith.constant 12 : index
    %22 = memref.load %arg2[%c12] : memref<96xf32, #tpu.memory_space<smem>>
    %23 = vector.broadcast %22 : f32 to vector<14x32xf32>
    %24 = arith.mulf %23, %17 : vector<14x32xf32>
    %25 = arith.addf %3, %24 : vector<14x32xf32>
    %c24 = arith.constant 24 : index
    %26 = memref.load %arg2[%c24] : memref<96xf32, #tpu.memory_space<smem>>
    %27 = vector.broadcast %26 : f32 to vector<14x32xf32>
    %28 = arith.mulf %27, %17 : vector<14x32xf32>
    %29 = arith.addf %5, %28 : vector<14x32xf32>
    %c36 = arith.constant 36 : index
    %30 = memref.load %arg2[%c36] : memref<96xf32, #tpu.memory_space<smem>>
    %31 = vector.broadcast %30 : f32 to vector<14x32xf32>
    %32 = arith.mulf %31, %17 : vector<14x32xf32>
    %33 = arith.addf %7, %32 : vector<14x32xf32>
    %c48 = arith.constant 48 : index
    %34 = memref.load %arg2[%c48] : memref<96xf32, #tpu.memory_space<smem>>
    %35 = vector.broadcast %34 : f32 to vector<14x32xf32>
    %36 = arith.mulf %35, %17 : vector<14x32xf32>
    %37 = arith.addf %9, %36 : vector<14x32xf32>
    %c60 = arith.constant 60 : index
    %38 = memref.load %arg2[%c60] : memref<96xf32, #tpu.memory_space<smem>>
    %39 = vector.broadcast %38 : f32 to vector<14x32xf32>
    %40 = arith.mulf %39, %17 : vector<14x32xf32>
    %41 = arith.addf %11, %40 : vector<14x32xf32>
    %c72 = arith.constant 72 : index
    %42 = memref.load %arg2[%c72] : memref<96xf32, #tpu.memory_space<smem>>
    %43 = vector.broadcast %42 : f32 to vector<14x32xf32>
    %44 = arith.mulf %43, %17 : vector<14x32xf32>
    %45 = arith.addf %13, %44 : vector<14x32xf32>
    %c84 = arith.constant 84 : index
    %46 = memref.load %arg2[%c84] : memref<96xf32, #tpu.memory_space<smem>>
    %47 = vector.broadcast %46 : f32 to vector<14x32xf32>
    %48 = arith.mulf %47, %17 : vector<14x32xf32>
    %49 = arith.addf %15, %48 : vector<14x32xf32>
    %c0_4 = arith.constant 0 : index
    %c1_5 = arith.constant 1 : index
    %c0_6 = arith.constant 0 : index
    %50 = vector.load %arg1[%c0_4, %c1_5, %c0_6] : memref<4x16x32xf32, #tpu.memory_space<vmem>>, vector<1x14x32xf32>
    %51 = vector.shape_cast %50 : vector<1x14x32xf32> to vector<14x32xf32>
    %c1_7 = arith.constant 1 : index
    %52 = memref.load %arg2[%c1_7] : memref<96xf32, #tpu.memory_space<smem>>
    %53 = vector.broadcast %52 : f32 to vector<14x32xf32>
    %54 = arith.mulf %53, %51 : vector<14x32xf32>
    %55 = arith.addf %21, %54 : vector<14x32xf32>
    %c13 = arith.constant 13 : index
    %56 = memref.load %arg2[%c13] : memref<96xf32, #tpu.memory_space<smem>>
    %57 = vector.broadcast %56 : f32 to vector<14x32xf32>
    %58 = arith.mulf %57, %51 : vector<14x32xf32>
    %59 = arith.addf %25, %58 : vector<14x32xf32>
    %c25 = arith.constant 25 : index
    %60 = memref.load %arg2[%c25] : memref<96xf32, #tpu.memory_space<smem>>
    %61 = vector.broadcast %60 : f32 to vector<14x32xf32>
    %62 = arith.mulf %61, %51 : vector<14x32xf32>
    %63 = arith.addf %29, %62 : vector<14x32xf32>
    %c37 = arith.constant 37 : index
    %64 = memref.load %arg2[%c37] : memref<96xf32, #tpu.memory_space<smem>>
    %65 = vector.broadcast %64 : f32 to vector<14x32xf32>
    %66 = arith.mulf %65, %51 : vector<14x32xf32>
    %67 = arith.addf %33, %66 : vector<14x32xf32>
    %c49 = arith.constant 49 : index
    %68 = memref.load %arg2[%c49] : memref<96xf32, #tpu.memory_space<smem>>
    %69 = vector.broadcast %68 : f32 to vector<14x32xf32>
    %70 = arith.mulf %69, %51 : vector<14x32xf32>
    %71 = arith.addf %37, %70 : vector<14x32xf32>
    %c61 = arith.constant 61 : index
    %72 = memref.load %arg2[%c61] : memref<96xf32, #tpu.memory_space<smem>>
    %73 = vector.broadcast %72 : f32 to vector<14x32xf32>
    %74 = arith.mulf %73, %51 : vector<14x32xf32>
    %75 = arith.addf %41, %74 : vector<14x32xf32>
    %c73 = arith.constant 73 : index
    %76 = memref.load %arg2[%c73] : memref<96xf32, #tpu.memory_space<smem>>
    %77 = vector.broadcast %76 : f32 to vector<14x32xf32>
    %78 = arith.mulf %77, %51 : vector<14x32xf32>
    %79 = arith.addf %45, %78 : vector<14x32xf32>
    %c85 = arith.constant 85 : index
    %80 = memref.load %arg2[%c85] : memref<96xf32, #tpu.memory_space<smem>>
    %81 = vector.broadcast %80 : f32 to vector<14x32xf32>
    %82 = arith.mulf %81, %51 : vector<14x32xf32>
    %83 = arith.addf %49, %82 : vector<14x32xf32>
    %c0_8 = arith.constant 0 : index
    %c2_9 = arith.constant 2 : index
    %c0_10 = arith.constant 0 : index
    %84 = vector.load %arg1[%c0_8, %c2_9, %c0_10] : memref<4x16x32xf32, #tpu.memory_space<vmem>>, vector<1x14x32xf32>
    %85 = vector.shape_cast %84 : vector<1x14x32xf32> to vector<14x32xf32>
    %c2_11 = arith.constant 2 : index
    %86 = memref.load %arg2[%c2_11] : memref<96xf32, #tpu.memory_space<smem>>
    %87 = vector.broadcast %86 : f32 to vector<14x32xf32>
    %88 = arith.mulf %87, %85 : vector<14x32xf32>
    %89 = arith.addf %55, %88 : vector<14x32xf32>
    %c14 = arith.constant 14 : index
    %90 = memref.load %arg2[%c14] : memref<96xf32, #tpu.memory_space<smem>>
    %91 = vector.broadcast %90 : f32 to vector<14x32xf32>
    %92 = arith.mulf %91, %85 : vector<14x32xf32>
    %93 = arith.addf %59, %92 : vector<14x32xf32>
    %c26 = arith.constant 26 : index
    %94 = memref.load %arg2[%c26] : memref<96xf32, #tpu.memory_space<smem>>
    %95 = vector.broadcast %94 : f32 to vector<14x32xf32>
    %96 = arith.mulf %95, %85 : vector<14x32xf32>
    %97 = arith.addf %63, %96 : vector<14x32xf32>
    %c38 = arith.constant 38 : index
    %98 = memref.load %arg2[%c38] : memref<96xf32, #tpu.memory_space<smem>>
    %99 = vector.broadcast %98 : f32 to vector<14x32xf32>
    %100 = arith.mulf %99, %85 : vector<14x32xf32>
    %101 = arith.addf %67, %100 : vector<14x32xf32>
    %c50 = arith.constant 50 : index
    %102 = memref.load %arg2[%c50] : memref<96xf32, #tpu.memory_space<smem>>
    %103 = vector.broadcast %102 : f32 to vector<14x32xf32>
    %104 = arith.mulf %103, %85 : vector<14x32xf32>
    %105 = arith.addf %71, %104 : vector<14x32xf32>
    %c62 = arith.constant 62 : index
    %106 = memref.load %arg2[%c62] : memref<96xf32, #tpu.memory_space<smem>>
    %107 = vector.broadcast %106 : f32 to vector<14x32xf32>
    %108 = arith.mulf %107, %85 : vector<14x32xf32>
    %109 = arith.addf %75, %108 : vector<14x32xf32>
    %c74 = arith.constant 74 : index
    %110 = memref.load %arg2[%c74] : memref<96xf32, #tpu.memory_space<smem>>
    %111 = vector.broadcast %110 : f32 to vector<14x32xf32>
    %112 = arith.mulf %111, %85 : vector<14x32xf32>
    %113 = arith.addf %79, %112 : vector<14x32xf32>
    %c86 = arith.constant 86 : index
    %114 = memref.load %arg2[%c86] : memref<96xf32, #tpu.memory_space<smem>>
    %115 = vector.broadcast %114 : f32 to vector<14x32xf32>
    %116 = arith.mulf %115, %85 : vector<14x32xf32>
    %117 = arith.addf %83, %116 : vector<14x32xf32>
    %c1_12 = arith.constant 1 : index
    %c0_13 = arith.constant 0 : index
    %c0_14 = arith.constant 0 : index
    %118 = vector.load %arg1[%c1_12, %c0_13, %c0_14] : memref<4x16x32xf32, #tpu.memory_space<vmem>>, vector<1x14x32xf32>
    %119 = vector.shape_cast %118 : vector<1x14x32xf32> to vector<14x32xf32>
    %c3_15 = arith.constant 3 : index
    %120 = memref.load %arg2[%c3_15] : memref<96xf32, #tpu.memory_space<smem>>
    %121 = vector.broadcast %120 : f32 to vector<14x32xf32>
    %122 = arith.mulf %121, %119 : vector<14x32xf32>
    %123 = arith.addf %89, %122 : vector<14x32xf32>
    %c15 = arith.constant 15 : index
    %124 = memref.load %arg2[%c15] : memref<96xf32, #tpu.memory_space<smem>>
    %125 = vector.broadcast %124 : f32 to vector<14x32xf32>
    %126 = arith.mulf %125, %119 : vector<14x32xf32>
    %127 = arith.addf %93, %126 : vector<14x32xf32>
    %c27 = arith.constant 27 : index
    %128 = memref.load %arg2[%c27] : memref<96xf32, #tpu.memory_space<smem>>
    %129 = vector.broadcast %128 : f32 to vector<14x32xf32>
    %130 = arith.mulf %129, %119 : vector<14x32xf32>
    %131 = arith.addf %97, %130 : vector<14x32xf32>
    %c39 = arith.constant 39 : index
    %132 = memref.load %arg2[%c39] : memref<96xf32, #tpu.memory_space<smem>>
    %133 = vector.broadcast %132 : f32 to vector<14x32xf32>
    %134 = arith.mulf %133, %119 : vector<14x32xf32>
    %135 = arith.addf %101, %134 : vector<14x32xf32>
    %c51 = arith.constant 51 : index
    %136 = memref.load %arg2[%c51] : memref<96xf32, #tpu.memory_space<smem>>
    %137 = vector.broadcast %136 : f32 to vector<14x32xf32>
    %138 = arith.mulf %137, %119 : vector<14x32xf32>
    %139 = arith.addf %105, %138 : vector<14x32xf32>
    %c63 = arith.constant 63 : index
    %140 = memref.load %arg2[%c63] : memref<96xf32, #tpu.memory_space<smem>>
    %141 = vector.broadcast %140 : f32 to vector<14x32xf32>
    %142 = arith.mulf %141, %119 : vector<14x32xf32>
    %143 = arith.addf %109, %142 : vector<14x32xf32>
    %c75 = arith.constant 75 : index
    %144 = memref.load %arg2[%c75] : memref<96xf32, #tpu.memory_space<smem>>
    %145 = vector.broadcast %144 : f32 to vector<14x32xf32>
    %146 = arith.mulf %145, %119 : vector<14x32xf32>
    %147 = arith.addf %113, %146 : vector<14x32xf32>
    %c87 = arith.constant 87 : index
    %148 = memref.load %arg2[%c87] : memref<96xf32, #tpu.memory_space<smem>>
    %149 = vector.broadcast %148 : f32 to vector<14x32xf32>
    %150 = arith.mulf %149, %119 : vector<14x32xf32>
    %151 = arith.addf %117, %150 : vector<14x32xf32>
    %c1_16 = arith.constant 1 : index
    %c1_17 = arith.constant 1 : index
    %c0_18 = arith.constant 0 : index
    %152 = vector.load %arg1[%c1_16, %c1_17, %c0_18] : memref<4x16x32xf32, #tpu.memory_space<vmem>>, vector<1x14x32xf32>
    %153 = vector.shape_cast %152 : vector<1x14x32xf32> to vector<14x32xf32>
    %c4_19 = arith.constant 4 : index
    %154 = memref.load %arg2[%c4_19] : memref<96xf32, #tpu.memory_space<smem>>
    %155 = vector.broadcast %154 : f32 to vector<14x32xf32>
    %156 = arith.mulf %155, %153 : vector<14x32xf32>
    %157 = arith.addf %123, %156 : vector<14x32xf32>
    %c16 = arith.constant 16 : index
    %158 = memref.load %arg2[%c16] : memref<96xf32, #tpu.memory_space<smem>>
    %159 = vector.broadcast %158 : f32 to vector<14x32xf32>
    %160 = arith.mulf %159, %153 : vector<14x32xf32>
    %161 = arith.addf %127, %160 : vector<14x32xf32>
    %c28 = arith.constant 28 : index
    %162 = memref.load %arg2[%c28] : memref<96xf32, #tpu.memory_space<smem>>
    %163 = vector.broadcast %162 : f32 to vector<14x32xf32>
    %164 = arith.mulf %163, %153 : vector<14x32xf32>
    %165 = arith.addf %131, %164 : vector<14x32xf32>
    %c40 = arith.constant 40 : index
    %166 = memref.load %arg2[%c40] : memref<96xf32, #tpu.memory_space<smem>>
    %167 = vector.broadcast %166 : f32 to vector<14x32xf32>
    %168 = arith.mulf %167, %153 : vector<14x32xf32>
    %169 = arith.addf %135, %168 : vector<14x32xf32>
    %c52 = arith.constant 52 : index
    %170 = memref.load %arg2[%c52] : memref<96xf32, #tpu.memory_space<smem>>
    %171 = vector.broadcast %170 : f32 to vector<14x32xf32>
    %172 = arith.mulf %171, %153 : vector<14x32xf32>
    %173 = arith.addf %139, %172 : vector<14x32xf32>
    %c64 = arith.constant 64 : index
    %174 = memref.load %arg2[%c64] : memref<96xf32, #tpu.memory_space<smem>>
    %175 = vector.broadcast %174 : f32 to vector<14x32xf32>
    %176 = arith.mulf %175, %153 : vector<14x32xf32>
    %177 = arith.addf %143, %176 : vector<14x32xf32>
    %c76 = arith.constant 76 : index
    %178 = memref.load %arg2[%c76] : memref<96xf32, #tpu.memory_space<smem>>
    %179 = vector.broadcast %178 : f32 to vector<14x32xf32>
    %180 = arith.mulf %179, %153 : vector<14x32xf32>
    %181 = arith.addf %147, %180 : vector<14x32xf32>
    %c88 = arith.constant 88 : index
    %182 = memref.load %arg2[%c88] : memref<96xf32, #tpu.memory_space<smem>>
    %183 = vector.broadcast %182 : f32 to vector<14x32xf32>
    %184 = arith.mulf %183, %153 : vector<14x32xf32>
    %185 = arith.addf %151, %184 : vector<14x32xf32>
    %c1_20 = arith.constant 1 : index
    %c2_21 = arith.constant 2 : index
    %c0_22 = arith.constant 0 : index
    %186 = vector.load %arg1[%c1_20, %c2_21, %c0_22] : memref<4x16x32xf32, #tpu.memory_space<vmem>>, vector<1x14x32xf32>
    %187 = vector.shape_cast %186 : vector<1x14x32xf32> to vector<14x32xf32>
    %c5_23 = arith.constant 5 : index
    %188 = memref.load %arg2[%c5_23] : memref<96xf32, #tpu.memory_space<smem>>
    %189 = vector.broadcast %188 : f32 to vector<14x32xf32>
    %190 = arith.mulf %189, %187 : vector<14x32xf32>
    %191 = arith.addf %157, %190 : vector<14x32xf32>
    %c17 = arith.constant 17 : index
    %192 = memref.load %arg2[%c17] : memref<96xf32, #tpu.memory_space<smem>>
    %193 = vector.broadcast %192 : f32 to vector<14x32xf32>
    %194 = arith.mulf %193, %187 : vector<14x32xf32>
    %195 = arith.addf %161, %194 : vector<14x32xf32>
    %c29 = arith.constant 29 : index
    %196 = memref.load %arg2[%c29] : memref<96xf32, #tpu.memory_space<smem>>
    %197 = vector.broadcast %196 : f32 to vector<14x32xf32>
    %198 = arith.mulf %197, %187 : vector<14x32xf32>
    %199 = arith.addf %165, %198 : vector<14x32xf32>
    %c41 = arith.constant 41 : index
    %200 = memref.load %arg2[%c41] : memref<96xf32, #tpu.memory_space<smem>>
    %201 = vector.broadcast %200 : f32 to vector<14x32xf32>
    %202 = arith.mulf %201, %187 : vector<14x32xf32>
    %203 = arith.addf %169, %202 : vector<14x32xf32>
    %c53 = arith.constant 53 : index
    %204 = memref.load %arg2[%c53] : memref<96xf32, #tpu.memory_space<smem>>
    %205 = vector.broadcast %204 : f32 to vector<14x32xf32>
    %206 = arith.mulf %205, %187 : vector<14x32xf32>
    %207 = arith.addf %173, %206 : vector<14x32xf32>
    %c65 = arith.constant 65 : index
    %208 = memref.load %arg2[%c65] : memref<96xf32, #tpu.memory_space<smem>>
    %209 = vector.broadcast %208 : f32 to vector<14x32xf32>
    %210 = arith.mulf %209, %187 : vector<14x32xf32>
    %211 = arith.addf %177, %210 : vector<14x32xf32>
    %c77 = arith.constant 77 : index
    %212 = memref.load %arg2[%c77] : memref<96xf32, #tpu.memory_space<smem>>
    %213 = vector.broadcast %212 : f32 to vector<14x32xf32>
    %214 = arith.mulf %213, %187 : vector<14x32xf32>
    %215 = arith.addf %181, %214 : vector<14x32xf32>
    %c89 = arith.constant 89 : index
    %216 = memref.load %arg2[%c89] : memref<96xf32, #tpu.memory_space<smem>>
    %217 = vector.broadcast %216 : f32 to vector<14x32xf32>
    %218 = arith.mulf %217, %187 : vector<14x32xf32>
    %219 = arith.addf %185, %218 : vector<14x32xf32>
    %c2_24 = arith.constant 2 : index
    %c0_25 = arith.constant 0 : index
    %c0_26 = arith.constant 0 : index
    %220 = vector.load %arg1[%c2_24, %c0_25, %c0_26] : memref<4x16x32xf32, #tpu.memory_space<vmem>>, vector<1x14x32xf32>
    %221 = vector.shape_cast %220 : vector<1x14x32xf32> to vector<14x32xf32>
    %c6_27 = arith.constant 6 : index
    %222 = memref.load %arg2[%c6_27] : memref<96xf32, #tpu.memory_space<smem>>
    %223 = vector.broadcast %222 : f32 to vector<14x32xf32>
    %224 = arith.mulf %223, %221 : vector<14x32xf32>
    %225 = arith.addf %191, %224 : vector<14x32xf32>
    %c18 = arith.constant 18 : index
    %226 = memref.load %arg2[%c18] : memref<96xf32, #tpu.memory_space<smem>>
    %227 = vector.broadcast %226 : f32 to vector<14x32xf32>
    %228 = arith.mulf %227, %221 : vector<14x32xf32>
    %229 = arith.addf %195, %228 : vector<14x32xf32>
    %c30 = arith.constant 30 : index
    %230 = memref.load %arg2[%c30] : memref<96xf32, #tpu.memory_space<smem>>
    %231 = vector.broadcast %230 : f32 to vector<14x32xf32>
    %232 = arith.mulf %231, %221 : vector<14x32xf32>
    %233 = arith.addf %199, %232 : vector<14x32xf32>
    %c42 = arith.constant 42 : index
    %234 = memref.load %arg2[%c42] : memref<96xf32, #tpu.memory_space<smem>>
    %235 = vector.broadcast %234 : f32 to vector<14x32xf32>
    %236 = arith.mulf %235, %221 : vector<14x32xf32>
    %237 = arith.addf %203, %236 : vector<14x32xf32>
    %c54 = arith.constant 54 : index
    %238 = memref.load %arg2[%c54] : memref<96xf32, #tpu.memory_space<smem>>
    %239 = vector.broadcast %238 : f32 to vector<14x32xf32>
    %240 = arith.mulf %239, %221 : vector<14x32xf32>
    %241 = arith.addf %207, %240 : vector<14x32xf32>
    %c66 = arith.constant 66 : index
    %242 = memref.load %arg2[%c66] : memref<96xf32, #tpu.memory_space<smem>>
    %243 = vector.broadcast %242 : f32 to vector<14x32xf32>
    %244 = arith.mulf %243, %221 : vector<14x32xf32>
    %245 = arith.addf %211, %244 : vector<14x32xf32>
    %c78 = arith.constant 78 : index
    %246 = memref.load %arg2[%c78] : memref<96xf32, #tpu.memory_space<smem>>
    %247 = vector.broadcast %246 : f32 to vector<14x32xf32>
    %248 = arith.mulf %247, %221 : vector<14x32xf32>
    %249 = arith.addf %215, %248 : vector<14x32xf32>
    %c90 = arith.constant 90 : index
    %250 = memref.load %arg2[%c90] : memref<96xf32, #tpu.memory_space<smem>>
    %251 = vector.broadcast %250 : f32 to vector<14x32xf32>
    %252 = arith.mulf %251, %221 : vector<14x32xf32>
    %253 = arith.addf %219, %252 : vector<14x32xf32>
    %c2_28 = arith.constant 2 : index
    %c1_29 = arith.constant 1 : index
    %c0_30 = arith.constant 0 : index
    %254 = vector.load %arg1[%c2_28, %c1_29, %c0_30] : memref<4x16x32xf32, #tpu.memory_space<vmem>>, vector<1x14x32xf32>
    %255 = vector.shape_cast %254 : vector<1x14x32xf32> to vector<14x32xf32>
    %c7_31 = arith.constant 7 : index
    %256 = memref.load %arg2[%c7_31] : memref<96xf32, #tpu.memory_space<smem>>
    %257 = vector.broadcast %256 : f32 to vector<14x32xf32>
    %258 = arith.mulf %257, %255 : vector<14x32xf32>
    %259 = arith.addf %225, %258 : vector<14x32xf32>
    %c19 = arith.constant 19 : index
    %260 = memref.load %arg2[%c19] : memref<96xf32, #tpu.memory_space<smem>>
    %261 = vector.broadcast %260 : f32 to vector<14x32xf32>
    %262 = arith.mulf %261, %255 : vector<14x32xf32>
    %263 = arith.addf %229, %262 : vector<14x32xf32>
    %c31 = arith.constant 31 : index
    %264 = memref.load %arg2[%c31] : memref<96xf32, #tpu.memory_space<smem>>
    %265 = vector.broadcast %264 : f32 to vector<14x32xf32>
    %266 = arith.mulf %265, %255 : vector<14x32xf32>
    %267 = arith.addf %233, %266 : vector<14x32xf32>
    %c43 = arith.constant 43 : index
    %268 = memref.load %arg2[%c43] : memref<96xf32, #tpu.memory_space<smem>>
    %269 = vector.broadcast %268 : f32 to vector<14x32xf32>
    %270 = arith.mulf %269, %255 : vector<14x32xf32>
    %271 = arith.addf %237, %270 : vector<14x32xf32>
    %c55 = arith.constant 55 : index
    %272 = memref.load %arg2[%c55] : memref<96xf32, #tpu.memory_space<smem>>
    %273 = vector.broadcast %272 : f32 to vector<14x32xf32>
    %274 = arith.mulf %273, %255 : vector<14x32xf32>
    %275 = arith.addf %241, %274 : vector<14x32xf32>
    %c67 = arith.constant 67 : index
    %276 = memref.load %arg2[%c67] : memref<96xf32, #tpu.memory_space<smem>>
    %277 = vector.broadcast %276 : f32 to vector<14x32xf32>
    %278 = arith.mulf %277, %255 : vector<14x32xf32>
    %279 = arith.addf %245, %278 : vector<14x32xf32>
    %c79 = arith.constant 79 : index
    %280 = memref.load %arg2[%c79] : memref<96xf32, #tpu.memory_space<smem>>
    %281 = vector.broadcast %280 : f32 to vector<14x32xf32>
    %282 = arith.mulf %281, %255 : vector<14x32xf32>
    %283 = arith.addf %249, %282 : vector<14x32xf32>
    %c91 = arith.constant 91 : index
    %284 = memref.load %arg2[%c91] : memref<96xf32, #tpu.memory_space<smem>>
    %285 = vector.broadcast %284 : f32 to vector<14x32xf32>
    %286 = arith.mulf %285, %255 : vector<14x32xf32>
    %287 = arith.addf %253, %286 : vector<14x32xf32>
    %c2_32 = arith.constant 2 : index
    %c2_33 = arith.constant 2 : index
    %c0_34 = arith.constant 0 : index
    %288 = vector.load %arg1[%c2_32, %c2_33, %c0_34] : memref<4x16x32xf32, #tpu.memory_space<vmem>>, vector<1x14x32xf32>
    %289 = vector.shape_cast %288 : vector<1x14x32xf32> to vector<14x32xf32>
    %c8 = arith.constant 8 : index
    %290 = memref.load %arg2[%c8] : memref<96xf32, #tpu.memory_space<smem>>
    %291 = vector.broadcast %290 : f32 to vector<14x32xf32>
    %292 = arith.mulf %291, %289 : vector<14x32xf32>
    %293 = arith.addf %259, %292 : vector<14x32xf32>
    %c20 = arith.constant 20 : index
    %294 = memref.load %arg2[%c20] : memref<96xf32, #tpu.memory_space<smem>>
    %295 = vector.broadcast %294 : f32 to vector<14x32xf32>
    %296 = arith.mulf %295, %289 : vector<14x32xf32>
    %297 = arith.addf %263, %296 : vector<14x32xf32>
    %c32 = arith.constant 32 : index
    %298 = memref.load %arg2[%c32] : memref<96xf32, #tpu.memory_space<smem>>
    %299 = vector.broadcast %298 : f32 to vector<14x32xf32>
    %300 = arith.mulf %299, %289 : vector<14x32xf32>
    %301 = arith.addf %267, %300 : vector<14x32xf32>
    %c44 = arith.constant 44 : index
    %302 = memref.load %arg2[%c44] : memref<96xf32, #tpu.memory_space<smem>>
    %303 = vector.broadcast %302 : f32 to vector<14x32xf32>
    %304 = arith.mulf %303, %289 : vector<14x32xf32>
    %305 = arith.addf %271, %304 : vector<14x32xf32>
    %c56 = arith.constant 56 : index
    %306 = memref.load %arg2[%c56] : memref<96xf32, #tpu.memory_space<smem>>
    %307 = vector.broadcast %306 : f32 to vector<14x32xf32>
    %308 = arith.mulf %307, %289 : vector<14x32xf32>
    %309 = arith.addf %275, %308 : vector<14x32xf32>
    %c68 = arith.constant 68 : index
    %310 = memref.load %arg2[%c68] : memref<96xf32, #tpu.memory_space<smem>>
    %311 = vector.broadcast %310 : f32 to vector<14x32xf32>
    %312 = arith.mulf %311, %289 : vector<14x32xf32>
    %313 = arith.addf %279, %312 : vector<14x32xf32>
    %c80 = arith.constant 80 : index
    %314 = memref.load %arg2[%c80] : memref<96xf32, #tpu.memory_space<smem>>
    %315 = vector.broadcast %314 : f32 to vector<14x32xf32>
    %316 = arith.mulf %315, %289 : vector<14x32xf32>
    %317 = arith.addf %283, %316 : vector<14x32xf32>
    %c92 = arith.constant 92 : index
    %318 = memref.load %arg2[%c92] : memref<96xf32, #tpu.memory_space<smem>>
    %319 = vector.broadcast %318 : f32 to vector<14x32xf32>
    %320 = arith.mulf %319, %289 : vector<14x32xf32>
    %321 = arith.addf %287, %320 : vector<14x32xf32>
    %c3_35 = arith.constant 3 : index
    %c0_36 = arith.constant 0 : index
    %c0_37 = arith.constant 0 : index
    %322 = vector.load %arg1[%c3_35, %c0_36, %c0_37] : memref<4x16x32xf32, #tpu.memory_space<vmem>>, vector<1x14x32xf32>
    %323 = vector.shape_cast %322 : vector<1x14x32xf32> to vector<14x32xf32>
    %c9 = arith.constant 9 : index
    %324 = memref.load %arg2[%c9] : memref<96xf32, #tpu.memory_space<smem>>
    %325 = vector.broadcast %324 : f32 to vector<14x32xf32>
    %326 = arith.mulf %325, %323 : vector<14x32xf32>
    %327 = arith.addf %293, %326 : vector<14x32xf32>
    %c21 = arith.constant 21 : index
    %328 = memref.load %arg2[%c21] : memref<96xf32, #tpu.memory_space<smem>>
    %329 = vector.broadcast %328 : f32 to vector<14x32xf32>
    %330 = arith.mulf %329, %323 : vector<14x32xf32>
    %331 = arith.addf %297, %330 : vector<14x32xf32>
    %c33 = arith.constant 33 : index
    %332 = memref.load %arg2[%c33] : memref<96xf32, #tpu.memory_space<smem>>
    %333 = vector.broadcast %332 : f32 to vector<14x32xf32>
    %334 = arith.mulf %333, %323 : vector<14x32xf32>
    %335 = arith.addf %301, %334 : vector<14x32xf32>
    %c45 = arith.constant 45 : index
    %336 = memref.load %arg2[%c45] : memref<96xf32, #tpu.memory_space<smem>>
    %337 = vector.broadcast %336 : f32 to vector<14x32xf32>
    %338 = arith.mulf %337, %323 : vector<14x32xf32>
    %339 = arith.addf %305, %338 : vector<14x32xf32>
    %c57 = arith.constant 57 : index
    %340 = memref.load %arg2[%c57] : memref<96xf32, #tpu.memory_space<smem>>
    %341 = vector.broadcast %340 : f32 to vector<14x32xf32>
    %342 = arith.mulf %341, %323 : vector<14x32xf32>
    %343 = arith.addf %309, %342 : vector<14x32xf32>
    %c69 = arith.constant 69 : index
    %344 = memref.load %arg2[%c69] : memref<96xf32, #tpu.memory_space<smem>>
    %345 = vector.broadcast %344 : f32 to vector<14x32xf32>
    %346 = arith.mulf %345, %323 : vector<14x32xf32>
    %347 = arith.addf %313, %346 : vector<14x32xf32>
    %c81 = arith.constant 81 : index
    %348 = memref.load %arg2[%c81] : memref<96xf32, #tpu.memory_space<smem>>
    %349 = vector.broadcast %348 : f32 to vector<14x32xf32>
    %350 = arith.mulf %349, %323 : vector<14x32xf32>
    %351 = arith.addf %317, %350 : vector<14x32xf32>
    %c93 = arith.constant 93 : index
    %352 = memref.load %arg2[%c93] : memref<96xf32, #tpu.memory_space<smem>>
    %353 = vector.broadcast %352 : f32 to vector<14x32xf32>
    %354 = arith.mulf %353, %323 : vector<14x32xf32>
    %355 = arith.addf %321, %354 : vector<14x32xf32>
    %c3_38 = arith.constant 3 : index
    %c1_39 = arith.constant 1 : index
    %c0_40 = arith.constant 0 : index
    %356 = vector.load %arg1[%c3_38, %c1_39, %c0_40] : memref<4x16x32xf32, #tpu.memory_space<vmem>>, vector<1x14x32xf32>
    %357 = vector.shape_cast %356 : vector<1x14x32xf32> to vector<14x32xf32>
    %c10 = arith.constant 10 : index
    %358 = memref.load %arg2[%c10] : memref<96xf32, #tpu.memory_space<smem>>
    %359 = vector.broadcast %358 : f32 to vector<14x32xf32>
    %360 = arith.mulf %359, %357 : vector<14x32xf32>
    %361 = arith.addf %327, %360 : vector<14x32xf32>
    %c22 = arith.constant 22 : index
    %362 = memref.load %arg2[%c22] : memref<96xf32, #tpu.memory_space<smem>>
    %363 = vector.broadcast %362 : f32 to vector<14x32xf32>
    %364 = arith.mulf %363, %357 : vector<14x32xf32>
    %365 = arith.addf %331, %364 : vector<14x32xf32>
    %c34 = arith.constant 34 : index
    %366 = memref.load %arg2[%c34] : memref<96xf32, #tpu.memory_space<smem>>
    %367 = vector.broadcast %366 : f32 to vector<14x32xf32>
    %368 = arith.mulf %367, %357 : vector<14x32xf32>
    %369 = arith.addf %335, %368 : vector<14x32xf32>
    %c46 = arith.constant 46 : index
    %370 = memref.load %arg2[%c46] : memref<96xf32, #tpu.memory_space<smem>>
    %371 = vector.broadcast %370 : f32 to vector<14x32xf32>
    %372 = arith.mulf %371, %357 : vector<14x32xf32>
    %373 = arith.addf %339, %372 : vector<14x32xf32>
    %c58 = arith.constant 58 : index
    %374 = memref.load %arg2[%c58] : memref<96xf32, #tpu.memory_space<smem>>
    %375 = vector.broadcast %374 : f32 to vector<14x32xf32>
    %376 = arith.mulf %375, %357 : vector<14x32xf32>
    %377 = arith.addf %343, %376 : vector<14x32xf32>
    %c70 = arith.constant 70 : index
    %378 = memref.load %arg2[%c70] : memref<96xf32, #tpu.memory_space<smem>>
    %379 = vector.broadcast %378 : f32 to vector<14x32xf32>
    %380 = arith.mulf %379, %357 : vector<14x32xf32>
    %381 = arith.addf %347, %380 : vector<14x32xf32>
    %c82 = arith.constant 82 : index
    %382 = memref.load %arg2[%c82] : memref<96xf32, #tpu.memory_space<smem>>
    %383 = vector.broadcast %382 : f32 to vector<14x32xf32>
    %384 = arith.mulf %383, %357 : vector<14x32xf32>
    %385 = arith.addf %351, %384 : vector<14x32xf32>
    %c94 = arith.constant 94 : index
    %386 = memref.load %arg2[%c94] : memref<96xf32, #tpu.memory_space<smem>>
    %387 = vector.broadcast %386 : f32 to vector<14x32xf32>
    %388 = arith.mulf %387, %357 : vector<14x32xf32>
    %389 = arith.addf %355, %388 : vector<14x32xf32>
    %c3_41 = arith.constant 3 : index
    %c2_42 = arith.constant 2 : index
    %c0_43 = arith.constant 0 : index
    %390 = vector.load %arg1[%c3_41, %c2_42, %c0_43] : memref<4x16x32xf32, #tpu.memory_space<vmem>>, vector<1x14x32xf32>
    %391 = vector.shape_cast %390 : vector<1x14x32xf32> to vector<14x32xf32>
    %c11 = arith.constant 11 : index
    %392 = memref.load %arg2[%c11] : memref<96xf32, #tpu.memory_space<smem>>
    %393 = vector.broadcast %392 : f32 to vector<14x32xf32>
    %394 = arith.mulf %393, %391 : vector<14x32xf32>
    %395 = arith.addf %361, %394 : vector<14x32xf32>
    %c23 = arith.constant 23 : index
    %396 = memref.load %arg2[%c23] : memref<96xf32, #tpu.memory_space<smem>>
    %397 = vector.broadcast %396 : f32 to vector<14x32xf32>
    %398 = arith.mulf %397, %391 : vector<14x32xf32>
    %399 = arith.addf %365, %398 : vector<14x32xf32>
    %c35 = arith.constant 35 : index
    %400 = memref.load %arg2[%c35] : memref<96xf32, #tpu.memory_space<smem>>
    %401 = vector.broadcast %400 : f32 to vector<14x32xf32>
    %402 = arith.mulf %401, %391 : vector<14x32xf32>
    %403 = arith.addf %369, %402 : vector<14x32xf32>
    %c47 = arith.constant 47 : index
    %404 = memref.load %arg2[%c47] : memref<96xf32, #tpu.memory_space<smem>>
    %405 = vector.broadcast %404 : f32 to vector<14x32xf32>
    %406 = arith.mulf %405, %391 : vector<14x32xf32>
    %407 = arith.addf %373, %406 : vector<14x32xf32>
    %c59 = arith.constant 59 : index
    %408 = memref.load %arg2[%c59] : memref<96xf32, #tpu.memory_space<smem>>
    %409 = vector.broadcast %408 : f32 to vector<14x32xf32>
    %410 = arith.mulf %409, %391 : vector<14x32xf32>
    %411 = arith.addf %377, %410 : vector<14x32xf32>
    %c71 = arith.constant 71 : index
    %412 = memref.load %arg2[%c71] : memref<96xf32, #tpu.memory_space<smem>>
    %413 = vector.broadcast %412 : f32 to vector<14x32xf32>
    %414 = arith.mulf %413, %391 : vector<14x32xf32>
    %415 = arith.addf %381, %414 : vector<14x32xf32>
    %c83 = arith.constant 83 : index
    %416 = memref.load %arg2[%c83] : memref<96xf32, #tpu.memory_space<smem>>
    %417 = vector.broadcast %416 : f32 to vector<14x32xf32>
    %418 = arith.mulf %417, %391 : vector<14x32xf32>
    %419 = arith.addf %385, %418 : vector<14x32xf32>
    %c95 = arith.constant 95 : index
    %420 = memref.load %arg2[%c95] : memref<96xf32, #tpu.memory_space<smem>>
    %421 = vector.broadcast %420 : f32 to vector<14x32xf32>
    %422 = arith.mulf %421, %391 : vector<14x32xf32>
    %423 = arith.addf %389, %422 : vector<14x32xf32>
    %424 = math.tanh %395 : vector<14x32xf32>
    %cst = arith.constant 5.000000e-01 : f32
    %425 = vector.broadcast %cst : f32 to vector<14x32xf32>
    %426 = arith.mulf %425, %411 : vector<14x32xf32>
    %427 = math.tanh %426 : vector<14x32xf32>
    %cst_44 = arith.constant 5.000000e-01 : f32
    %428 = vector.broadcast %cst_44 : f32 to vector<14x32xf32>
    %429 = arith.mulf %428, %427 : vector<14x32xf32>
    %cst_45 = arith.constant 5.000000e-01 : f32
    %430 = vector.broadcast %cst_45 : f32 to vector<14x32xf32>
    %431 = arith.addf %429, %430 : vector<14x32xf32>
    %432 = arith.mulf %424, %431 : vector<14x32xf32>
    %c0_46 = arith.constant 0 : index
    %c0_47 = arith.constant 0 : index
    %c0_48 = arith.constant 0 : index
    %433 = vector.load %arg4[%c0_46, %c0_47, %c0_48] : memref<4x14x32xf32, #tpu.memory_space<vmem>>, vector<1x14x32xf32>
    %434 = vector.shape_cast %433 : vector<1x14x32xf32> to vector<14x32xf32>
    %435 = vector.shape_cast %432 : vector<14x32xf32> to vector<1x14x32xf32>
    tpu.vector_store %arg4[%c0_46, %c0_47, %c0_48], %435 {strides = array<i32>} : memref<4x14x32xf32, #tpu.memory_space<vmem>>, vector<1x14x32xf32>,
    %436 = math.tanh %399 : vector<14x32xf32>
    %cst_49 = arith.constant 5.000000e-01 : f32
    %437 = vector.broadcast %cst_49 : f32 to vector<14x32xf32>
    %438 = arith.mulf %437, %415 : vector<14x32xf32>
    %439 = math.tanh %438 : vector<14x32xf32>
    %cst_50 = arith.constant 5.000000e-01 : f32
    %440 = vector.broadcast %cst_50 : f32 to vector<14x32xf32>
    %441 = arith.mulf %440, %439 : vector<14x32xf32>
    %cst_51 = arith.constant 5.000000e-01 : f32
    %442 = vector.broadcast %cst_51 : f32 to vector<14x32xf32>
    %443 = arith.addf %441, %442 : vector<14x32xf32>
    %444 = arith.mulf %436, %443 : vector<14x32xf32>
    %c1_52 = arith.constant 1 : index
    %c0_53 = arith.constant 0 : index
    %c0_54 = arith.constant 0 : index
    %445 = vector.load %arg4[%c1_52, %c0_53, %c0_54] : memref<4x14x32xf32, #tpu.memory_space<vmem>>, vector<1x14x32xf32>
    %446 = vector.shape_cast %445 : vector<1x14x32xf32> to vector<14x32xf32>
    %447 = vector.shape_cast %444 : vector<14x32xf32> to vector<1x14x32xf32>
    tpu.vector_store %arg4[%c1_52, %c0_53, %c0_54], %447 {strides = array<i32>} : memref<4x14x32xf32, #tpu.memory_space<vmem>>, vector<1x14x32xf32>,
    %448 = math.tanh %403 : vector<14x32xf32>
    %cst_55 = arith.constant 5.000000e-01 : f32
    %449 = vector.broadcast %cst_55 : f32 to vector<14x32xf32>
    %450 = arith.mulf %449, %419 : vector<14x32xf32>
    %451 = math.tanh %450 : vector<14x32xf32>
    %cst_56 = arith.constant 5.000000e-01 : f32
    %452 = vector.broadcast %cst_56 : f32 to vector<14x32xf32>
    %453 = arith.mulf %452, %451 : vector<14x32xf32>
    %cst_57 = arith.constant 5.000000e-01 : f32
    %454 = vector.broadcast %cst_57 : f32 to vector<14x32xf32>
    %455 = arith.addf %453, %454 : vector<14x32xf32>
    %456 = arith.mulf %448, %455 : vector<14x32xf32>
    %c2_58 = arith.constant 2 : index
    %c0_59 = arith.constant 0 : index
    %c0_60 = arith.constant 0 : index
    %457 = vector.load %arg4[%c2_58, %c0_59, %c0_60] : memref<4x14x32xf32, #tpu.memory_space<vmem>>, vector<1x14x32xf32>
    %458 = vector.shape_cast %457 : vector<1x14x32xf32> to vector<14x32xf32>
    %459 = vector.shape_cast %456 : vector<14x32xf32> to vector<1x14x32xf32>
    tpu.vector_store %arg4[%c2_58, %c0_59, %c0_60], %459 {strides = array<i32>} : memref<4x14x32xf32, #tpu.memory_space<vmem>>, vector<1x14x32xf32>,
    %460 = math.tanh %407 : vector<14x32xf32>
    %cst_61 = arith.constant 5.000000e-01 : f32
    %461 = vector.broadcast %cst_61 : f32 to vector<14x32xf32>
    %462 = arith.mulf %461, %423 : vector<14x32xf32>
    %463 = math.tanh %462 : vector<14x32xf32>
    %cst_62 = arith.constant 5.000000e-01 : f32
    %464 = vector.broadcast %cst_62 : f32 to vector<14x32xf32>
    %465 = arith.mulf %464, %463 : vector<14x32xf32>
    %cst_63 = arith.constant 5.000000e-01 : f32
    %466 = vector.broadcast %cst_63 : f32 to vector<14x32xf32>
    %467 = arith.addf %465, %466 : vector<14x32xf32>
    %468 = arith.mulf %460, %467 : vector<14x32xf32>
    %c3_64 = arith.constant 3 : index
    %c0_65 = arith.constant 0 : index
    %c0_66 = arith.constant 0 : index
    %469 = vector.load %arg4[%c3_64, %c0_65, %c0_66] : memref<4x14x32xf32, #tpu.memory_space<vmem>>, vector<1x14x32xf32>
    %470 = vector.shape_cast %469 : vector<1x14x32xf32> to vector<14x32xf32>
    %471 = vector.shape_cast %468 : vector<14x32xf32> to vector<1x14x32xf32>
    tpu.vector_store %arg4[%c3_64, %c0_65, %c0_66], %471 {strides = array<i32>} : memref<4x14x32xf32, #tpu.memory_space<vmem>>, vector<1x14x32xf32>,
    return
  }
  func.func @transform_0(%arg0: i32) -> (i32, i32, i32) {
    %c0_i32 = arith.constant 0 : i32
    %c0_i32_0 = arith.constant 0 : i32
    %c0_i32_1 = arith.constant 0 : i32
    return %c0_i32, %c0_i32_0, %arg0 : i32, i32, i32
  }
  func.func @transform_1(%arg0: i32) -> i32 {
    %c0_i32 = arith.constant 0 : i32
    %c0_i32_0 = arith.constant 0 : i32
    return %c0_i32 : i32
  }
  func.func @transform_2(%arg0: i32) -> i32 {
    %c0_i32 = arith.constant 0 : i32
    %c0_i32_0 = arith.constant 0 : i32
    return %c0_i32 : i32
  }
  func.func @transform_3(%arg0: i32) -> (i32, i32, i32) {
    %c0_i32 = arith.constant 0 : i32
    %c0_i32_0 = arith.constant 0 : i32
    %c0_i32_1 = arith.constant 0 : i32
    return %c0_i32, %c0_i32_0, %arg0 : i32, i32, i32
  }
}

</mosaic_0001>

<llo_original>
// kernel: tpu_custom_call.1
$region0: #{tpu_custom_call.1}
  #allocation0 [shape = 'u32[]', space=smem, size = 0x4, offset = 0x4, fixed_abs, tag = 'smem constant byte address 0x4 - core index']
  #allocation1 [shape = 'u32[72,128]{1,0:T(1,128)}', space=vmem, size = 0x9000, scoped, tag = 'internal scratch']
  %s0 = inlined_call_operand.hbm [shape: f32[4,16,32], index: 0, kind: input, shape index: {}]
  %s1 = inlined_call_operand.hbm [shape: f32[96], index: 1, kind: input, shape index: {}]
  %s2 = inlined_call_operand.vmem [shape: f32[8], index: 2, kind: input, shape index: {}]
  %s3 = inlined_call_operand.vmem [shape: f32[4,14,32], index: 3, kind: output, shape index: {}]
  %s4 = sld [smem:[#allocation0]]
  $region34: #{tpu_custom_call.1} parent=0
    _
  %s6 = ssub.s32 1, %s4
  %s7 = scalar_select 0, %s6, %s4
  $region1: #{tpu_custom_call.1} parent=0
    #allocation2 [shape = 'u8[32768]{0}', space=vmem, size = 0x8000, scoped, tag = 'input window, operand 0, single buffered']
    #allocation3 [shape = 's32[1]{0}', space=sflag, size = 0x4, scoped, tag = 'scoped memory for tpu_custom_call.1']
    #allocation4 [shape = 's32[1]{0}', space=sflag, size = 0x4, scoped, tag = 'scoped memory for tpu_custom_call.1']
    #allocation5 [shape = 's32[1]{0}', space=sflag, size = 0x4, scoped, tag = 'scoped memory for tpu_custom_call.1']
    #allocation6 [shape = 'u8[512]{0}', space=smem, size = 0x200, scoped, tag = 'input window, operand 1, single buffered']
    #allocation7 [shape = 'u8[512]{0}', space=smem, size = 0x200, scoped, tag = 'input window, operand 2, single buffered']
    %8 = vsyncpa [#allocation3], 0
    %9 = vsyncpa [#allocation4], 0
    %10 = vsyncpa [#allocation5], 0
    // Predicated region
    $region2: #{tpu_custom_call.1} parent=1 // pred_check
      _
    $region3: #{tpu_custom_call.1} parent=1 // pred_check_branch
      %12 = sbr.rel (0) target = $region5
    $region4: #{tpu_custom_call.1} parent=1 // pred_region
      %14 = vsyncadd [#allocation3], 0
      %s15 = sshll.u32 %s0, 4
      %s16 = int_to_ptr.hbm [resolvable:$true] %s15
      %s17 = sshll.u32 [#allocation2], 4
      %s18 = int_to_ptr.vmem [resolvable:$true] %s17
      %23 = dma.hbm_to_vmem [thread:$0]  %s16, 1024, %s18, [#allocation3], 128, 128, 8
    $region5: #{tpu_custom_call.1} parent=1 // pred_fallthru
      _
    // Predicated region
    $region6: #{tpu_custom_call.1} parent=1 // pred_check
      _
    $region7: #{tpu_custom_call.1} parent=1 // pred_check_branch
      %25 = sbr.rel (0) target = $region9
    $region8: #{tpu_custom_call.1} parent=1 // pred_region
      %27 = vsyncadd [#allocation4], 0
      %s29 = sshll.u32 %s1, 4
      %s30 = int_to_ptr.hbm [resolvable:$true] %s29
      %32 = dma.hbm_to_smem %s30, 16, [#allocation6], [#allocation4]
    $region9: #{tpu_custom_call.1} parent=1 // pred_fallthru
      _
    // Predicated region
    $region10: #{tpu_custom_call.1} parent=1 // pred_check
      _
    $region11: #{tpu_custom_call.1} parent=1 // pred_check_branch
      %34 = sbr.rel (0) target = $region13
    $region12: #{tpu_custom_call.1} parent=1 // pred_region
      %36 = vsyncadd [#allocation5], 0
      %s38 = sshll.u32 %s2, 4
      %s39 = int_to_ptr.vmem [resolvable:$true] %s38
      %41 = dma.vmem_to_smem %s39, 16, [#allocation7], [#allocation5]
    $region13: #{tpu_custom_call.1} parent=1 // pred_fallthru
      _
    // Predicated region
    $region14: #{tpu_custom_call.1} parent=1 // pred_check
      _
    $region15: #{tpu_custom_call.1} parent=1 // pred_check_branch
      %43 = sbr.rel (0) target = $region17
    $region16: #{tpu_custom_call.1} parent=1 // pred_region
      %45 = dma.done [#allocation3], 1024
    $region17: #{tpu_custom_call.1} parent=1 // pred_fallthru
      _
    // Predicated region
    $region18: #{tpu_custom_call.1} parent=1 // pred_check
      _
    $region19: #{tpu_custom_call.1} parent=1 // pred_check_branch
      %47 = sbr.rel (0) target = $region21
    $region20: #{tpu_custom_call.1} parent=1 // pred_region
      %49 = dma.done [#allocation4], 16
    $region21: #{tpu_custom_call.1} parent=1 // pred_fallthru
      _
    // Predicated region
    $region22: #{tpu_custom_call.1} parent=1 // pred_check
      _
    $region23: #{tpu_custom_call.1} parent=1 // pred_check_branch
      %51 = sbr.rel (0) target = $region25
    $region24: #{tpu_custom_call.1} parent=1 // pred_region
      %53 = dma.done [#allocation5], 16
    $region25: #{tpu_custom_call.1} parent=1 // pred_fallthru
      _
    %54 = sfence
    %s55 = sld [smem:[#allocation7]]
    %v56 = vstv %s55
    %s57 = sld [smem:[#allocation7 + $0x1]]
    %v58 = vstv %s57
    %s59 = sld [smem:[#allocation7 + $0x2]]
    %v60 = vstv %s59
    %s61 = sld [smem:[#allocation7 + $0x3]]
    %v62 = vstv %s61
    %s63 = sld [smem:[#allocation7 + $0x4]]
    %v64 = vstv %s63
    %s65 = sld [smem:[#allocation7 + $0x5]]
    %v66 = vstv %s65
    %s67 = sld [smem:[#allocation7 + $0x6]]
    %v68 = vstv %s67
    %s69 = sld [smem:[#allocation7 + $0x7]]
    %v70 = vstv %s69
    %v71 = vld [vmem:[#allocation2] sm:$0xff]
    %v72 = vld [vmem:[#allocation2 + $0x8] sm:$0x3f]
    %s73 = sld [smem:[#allocation6]]
    %v74 = vstv %s73
    %v75 = vmul.f32 %v74, %v71
    %v76 = vmul.f32 %v74, %v72
    %v77 = vadd.f32 %v56, %v75
    %v78 = vadd.f32 %v56, %v76
    %s79 = sld [smem:[#allocation6 + $0xc]]
    %v80 = vstv %s79
    %v81 = vmul.f32 %v80, %v71
    %v82 = vmul.f32 %v80, %v72
    %v83 = vadd.f32 %v58, %v81
    %v84 = vadd.f32 %v58, %v82
    %s85 = sld [smem:[#allocation6 + $0x18]]
    %v86 = vstv %s85
    %v87 = vmul.f32 %v86, %v71
    %v88 = vmul.f32 %v86, %v72
    %v89 = vadd.f32 %v60, %v87
    %v90 = vadd.f32 %v60, %v88
    %s91 = sld [smem:[#allocation6 + $0x24]]
    %v92 = vstv %s91
    %v93 = vmul.f32 %v92, %v71
    %v94 = vmul.f32 %v92, %v72
    %v95 = vadd.f32 %v62, %v93
    %v96 = vadd.f32 %v62, %v94
    %s97 = sld [smem:[#allocation6 + $0x30]]
    %v98 = vstv %s97
    %v99 = vmul.f32 %v98, %v71
    %v100 = vmul.f32 %v98, %v72
    %v101 = vadd.f32 %v64, %v99
    %v102 = vadd.f32 %v64, %v100
    %s103 = sld [smem:[#allocation6 + $0x3c]]
    %v104 = vstv %s103
    %v105 = vmul.f32 %v104, %v71
    %v106 = vmul.f32 %v104, %v72
    %v107 = vadd.f32 %v66, %v105
    %v108 = vadd.f32 %v66, %v106
    %s109 = sld [smem:[#allocation6 + $0x48]]
    %v110 = vstv %s109
    %v111 = vmul.f32 %v110, %v71
    %v112 = vmul.f32 %v110, %v72
    %v113 = vadd.f32 %v68, %v111
    %v114 = vadd.f32 %v68, %v112
    %s115 = sld [smem:[#allocation6 + $0x54]]
    %v116 = vstv %s115
    %v117 = vmul.f32 %v116, %v71
    %v118 = vmul.f32 %v116, %v72
    %v119 = vadd.f32 %v70, %v117
    %v120 = vadd.f32 %v70, %v118
    %v121 = vld [vmem:[#allocation2 + $0x1] sm:$0xff]
    %v122 = vld [vmem:[#allocation2 + $0x9] sm:$0x3f]
    %s123 = sld [smem:[#allocation6 + $0x1]]
    %v124 = vstv %s123
    %v125 = vmul.f32 %v124, %v121
    %v126 = vmul.f32 %v124, %v122
    %v127 = vadd.f32 %v77, %v125
    %v128 = vadd.f32 %v78, %v126
    %s129 = sld [smem:[#allocation6 + $0xd]]
    %v130 = vstv %s129
    %v131 = vmul.f32 %v130, %v121
    %v132 = vmul.f32 %v130, %v122
    %v133 = vadd.f32 %v83, %v131
    %v134 = vadd.f32 %v84, %v132
    %s135 = sld [smem:[#allocation6 + $0x19]]
    %v136 = vstv %s135
    %v137 = vmul.f32 %v136, %v121
    %v138 = vmul.f32 %v136, %v122
    %v139 = vadd.f32 %v89, %v137
    %v140 = vadd.f32 %v90, %v138
    %s141 = sld [smem:[#allocation6 + $0x25]]
    %v142 = vstv %s141
    %v143 = vmul.f32 %v142, %v121
    %v144 = vmul.f32 %v142, %v122
    %v145 = vadd.f32 %v95, %v143
    %v146 = vadd.f32 %v96, %v144
    %s147 = sld [smem:[#allocation6 + $0x31]]
    %v148 = vstv %s147
    %v149 = vmul.f32 %v148, %v121
    %v150 = vmul.f32 %v148, %v122
    %v151 = vadd.f32 %v101, %v149
    %v152 = vadd.f32 %v102, %v150
    %s153 = sld [smem:[#allocation6 + $0x3d]]
    %v154 = vstv %s153
    %v155 = vmul.f32 %v154, %v121
    %v156 = vmul.f32 %v154, %v122
    %v157 = vadd.f32 %v107, %v155
    %v158 = vadd.f32 %v108, %v156
    %s159 = sld [smem:[#allocation6 + $0x49]]
    %v160 = vstv %s159
    %v161 = vmul.f32 %v160, %v121
    %v162 = vmul.f32 %v160, %v122
    %v163 = vadd.f32 %v113, %v161
    %v164 = vadd.f32 %v114, %v162
    %s165 = sld [smem:[#allocation6 + $0x55]]
    %v166 = vstv %s165
    %v167 = vmul.f32 %v166, %v121
    %v168 = vmul.f32 %v166, %v122
    %v169 = vadd.f32 %v119, %v167
    %v170 = vadd.f32 %v120, %v168
    %v171 = vld [vmem:[#allocation2 + $0x2] sm:$0xff]
    %v172 = vld [vmem:[#allocation2 + $0xa] sm:$0x3f]
    %s173 = sld [smem:[#allocation6 + $0x2]]
    %v174 = vstv %s173
    %v175 = vmul.f32 %v174, %v171
    %v176 = vmul.f32 %v174, %v172
    %v177 = vadd.f32 %v127, %v175
    %v178 = vadd.f32 %v128, %v176
    %s179 = sld [smem:[#allocation6 + $0xe]]
    %v180 = vstv %s179
    %v181 = vmul.f32 %v180, %v171
    %v182 = vmul.f32 %v180, %v172
    %v183 = vadd.f32 %v133, %v181
    %v184 = vadd.f32 %v134, %v182
    %s185 = sld [smem:[#allocation6 + $0x1a]]
    %v186 = vstv %s185
    %v187 = vmul.f32 %v186, %v171
    %v188 = vmul.f32 %v186, %v172
    %v189 = vadd.f32 %v139, %v187
    %v190 = vadd.f32 %v140, %v188
    %s191 = sld [smem:[#allocation6 + $0x26]]
    %v192 = vstv %s191
    %v193 = vmul.f32 %v192, %v171
    %v194 = vmul.f32 %v192, %v172
    %v195 = vadd.f32 %v145, %v193
    %v196 = vadd.f32 %v146, %v194
    %s197 = sld [smem:[#allocation6 + $0x32]]
    %v198 = vstv %s197
    %v199 = vmul.f32 %v198, %v171
    %v200 = vmul.f32 %v198, %v172
    %v201 = vadd.f32 %v151, %v199
    %v202 = vadd.f32 %v152, %v200
    %s203 = sld [smem:[#allocation6 + $0x3e]]
    %v204 = vstv %s203
    %v205 = vmul.f32 %v204, %v171
    %v206 = vmul.f32 %v204, %v172
    %v207 = vadd.f32 %v157, %v205
    %v208 = vadd.f32 %v158, %v206
    %s209 = sld [smem:[#allocation6 + $0x4a]]
    %v210 = vstv %s209
    %v211 = vmul.f32 %v210, %v171
    %v212 = vmul.f32 %v210, %v172
    %v213 = vadd.f32 %v163, %v211
    %v214 = vadd.f32 %v164, %v212
    %s215 = sld [smem:[#allocation6 + $0x56]]
    %v216 = vstv %s215
    %v217 = vmul.f32 %v216, %v171
    %v218 = vmul.f32 %v216, %v172
    %v219 = vadd.f32 %v169, %v217
    %v220 = vadd.f32 %v170, %v218
    %s221 = scalar_lea.vmem [#allocation2], 16
    %v222 = vld [vmem:[%s221] sm:$0xff]
    %v223 = vld [vmem:[%s221 + $0x8] sm:$0x3f]
    %s224 = sld [smem:[#allocation6 + $0x3]]
    %v225 = vstv %s224
    %v226 = vmul.f32 %v225, %v222
    %v227 = vmul.f32 %v225, %v223
    %v228 = vadd.f32 %v177, %v226
    %v229 = vadd.f32 %v178, %v227
    %s230 = sld [smem:[#allocation6 + $0xf]]
    %v231 = vstv %s230
    %v232 = vmul.f32 %v231, %v222
    %v233 = vmul.f32 %v231, %v223
    %v234 = vadd.f32 %v183, %v232
    %v235 = vadd.f32 %v184, %v233
    %s236 = sld [smem:[#allocation6 + $0x1b]]
    %v237 = vstv %s236
    %v238 = vmul.f32 %v237, %v222
    %v239 = vmul.f32 %v237, %v223
    %v240 = vadd.f32 %v189, %v238
    %v241 = vadd.f32 %v190, %v239
    %s242 = sld [smem:[#allocation6 + $0x27]]
    %v243 = vstv %s242
    %v244 = vmul.f32 %v243, %v222
    %v245 = vmul.f32 %v243, %v223
    %v246 = vadd.f32 %v195, %v244
    %v247 = vadd.f32 %v196, %v245
    %s248 = sld [smem:[#allocation6 + $0x33]]
    %v249 = vstv %s248
    %v250 = vmul.f32 %v249, %v222
    %v251 = vmul.f32 %v249, %v223
    %v252 = vadd.f32 %v201, %v250
    %v253 = vadd.f32 %v202, %v251
    %s254 = sld [smem:[#allocation6 + $0x3f]]
    %v255 = vstv %s254
    %v256 = vmul.f32 %v255, %v222
    %v257 = vmul.f32 %v255, %v223
    %v258 = vadd.f32 %v207, %v256
    %v259 = vadd.f32 %v208, %v257
    %s260 = sld [smem:[#allocation6 + $0x4b]]
    %v261 = vstv %s260
    %v262 = vmul.f32 %v261, %v222
    %v263 = vmul.f32 %v261, %v223
    %v264 = vadd.f32 %v213, %v262
    %v265 = vadd.f32 %v214, %v263
    %s266 = sld [smem:[#allocation6 + $0x57]]
    %v267 = vstv %s266
    %v268 = vmul.f32 %v267, %v222
    %v269 = vmul.f32 %v267, %v223
    %v270 = vadd.f32 %v219, %v268
    %v271 = vadd.f32 %v220, %v269
    %v272 = vld [vmem:[%s221 + $0x1] sm:$0xff]
    %v273 = vld [vmem:[%s221 + $0x9] sm:$0x3f]
    %s274 = sld [smem:[#allocation6 + $0x4]]
    %v275 = vstv %s274
    %v276 = vmul.f32 %v275, %v272
    %v277 = vmul.f32 %v275, %v273
    %v278 = vadd.f32 %v228, %v276
    %v279 = vadd.f32 %v229, %v277
    %s280 = sld [smem:[#allocation6 + $0x10]]
    %v281 = vstv %s280
    %v282 = vmul.f32 %v281, %v272
    %v283 = vmul.f32 %v281, %v273
    %v284 = vadd.f32 %v234, %v282
    %v285 = vadd.f32 %v235, %v283
    %s286 = sld [smem:[#allocation6 + $0x1c]]
    %v287 = vstv %s286
    %v288 = vmul.f32 %v287, %v272
    %v289 = vmul.f32 %v287, %v273
    %v290 = vadd.f32 %v240, %v288
    %v291 = vadd.f32 %v241, %v289
    %s292 = sld [smem:[#allocation6 + $0x28]]
    %v293 = vstv %s292
    %v294 = vmul.f32 %v293, %v272
    %v295 = vmul.f32 %v293, %v273
    %v296 = vadd.f32 %v246, %v294
    %v297 = vadd.f32 %v247, %v295
    %s298 = sld [smem:[#allocation6 + $0x34]]
    %v299 = vstv %s298
    %v300 = vmul.f32 %v299, %v272
    %v301 = vmul.f32 %v299, %v273
    %v302 = vadd.f32 %v252, %v300
    %v303 = vadd.f32 %v253, %v301
    %s304 = sld [smem:[#allocation6 + $0x40]]
    %v305 = vstv %s304
    %v306 = vmul.f32 %v305, %v272
    %v307 = vmul.f32 %v305, %v273
    %v308 = vadd.f32 %v258, %v306
    %v309 = vadd.f32 %v259, %v307
    %s310 = sld [smem:[#allocation6 + $0x4c]]
    %v311 = vstv %s310
    %v312 = vmul.f32 %v311, %v272
    %v313 = vmul.f32 %v311, %v273
    %v314 = vadd.f32 %v264, %v312
    %v315 = vadd.f32 %v265, %v313
    %s316 = sld [smem:[#allocation6 + $0x58]]
    %v317 = vstv %s316
    %v318 = vmul.f32 %v317, %v272
    %v319 = vmul.f32 %v317, %v273
    %v320 = vadd.f32 %v270, %v318
    %v321 = vadd.f32 %v271, %v319
    %v322 = vld [vmem:[%s221 + $0x2] sm:$0xff]
    %v323 = vld [vmem:[%s221 + $0xa] sm:$0x3f]
    %s324 = sld [smem:[#allocation6 + $0x5]]
    %v325 = vstv %s324
    %v326 = vmul.f32 %v325, %v322
    %v327 = vmul.f32 %v325, %v323
    %v328 = vadd.f32 %v278, %v326
    %v329 = vadd.f32 %v279, %v327
    %s330 = sld [smem:[#allocation6 + $0x11]]
    %v331 = vstv %s330
    %v332 = vmul.f32 %v331, %v322
    %v333 = vmul.f32 %v331, %v323
    %v334 = vadd.f32 %v284, %v332
    %v335 = vadd.f32 %v285, %v333
    %s336 = sld [smem:[#allocation6 + $0x1d]]
    %v337 = vstv %s336
    %v338 = vmul.f32 %v337, %v322
    %v339 = vmul.f32 %v337, %v323
    %v340 = vadd.f32 %v290, %v338
    %v341 = vadd.f32 %v291, %v339
    %s342 = sld [smem:[#allocation6 + $0x29]]
    %v343 = vstv %s342
    %v344 = vmul.f32 %v343, %v322
    %v345 = vmul.f32 %v343, %v323
    %v346 = vadd.f32 %v296, %v344
    %v347 = vadd.f32 %v297, %v345
    %s348 = sld [smem:[#allocation6 + $0x35]]
    %v349 = vstv %s348
    %v350 = vmul.f32 %v349, %v322
    %v351 = vmul.f32 %v349, %v323
    %v352 = vadd.f32 %v302, %v350
    %v353 = vadd.f32 %v303, %v351
    %s354 = sld [smem:[#allocation6 + $0x41]]
    %v355 = vstv %s354
    %v356 = vmul.f32 %v355, %v322
    %v357 = vmul.f32 %v355, %v323
    %v358 = vadd.f32 %v308, %v356
    %v359 = vadd.f32 %v309, %v357
    %s360 = sld [smem:[#allocation6 + $0x4d]]
    %v361 = vstv %s360
    %v362 = vmul.f32 %v361, %v322
    %v363 = vmul.f32 %v361, %v323
    %v364 = vadd.f32 %v314, %v362
    %v365 = vadd.f32 %v315, %v363
    %s366 = sld [smem:[#allocation6 + $0x59]]
    %v367 = vstv %s366
    %v368 = vmul.f32 %v367, %v322
    %v369 = vmul.f32 %v367, %v323
    %v370 = vadd.f32 %v320, %v368
    %v371 = vadd.f32 %v321, %v369
    %s372 = scalar_lea.vmem [#allocation2], 32
    %v373 = vld [vmem:[%s372] sm:$0xff]
    %v374 = vld [vmem:[%s372 + $0x8] sm:$0x3f]
    %s375 = sld [smem:[#allocation6 + $0x6]]
    %v376 = vstv %s375
    %v377 = vmul.f32 %v376, %v373
    %v378 = vmul.f32 %v376, %v374
    %v379 = vadd.f32 %v328, %v377
    %v380 = vadd.f32 %v329, %v378
    %s381 = sld [smem:[#allocation6 + $0x12]]
    %v382 = vstv %s381
    %v383 = vmul.f32 %v382, %v373
    %v384 = vmul.f32 %v382, %v374
    %v385 = vadd.f32 %v334, %v383
    %v386 = vadd.f32 %v335, %v384
    %s387 = sld [smem:[#allocation6 + $0x1e]]
    %v388 = vstv %s387
    %v389 = vmul.f32 %v388, %v373
    %v390 = vmul.f32 %v388, %v374
    %v391 = vadd.f32 %v340, %v389
    %v392 = vadd.f32 %v341, %v390
    %s393 = sld [smem:[#allocation6 + $0x2a]]
    %v394 = vstv %s393
    %v395 = vmul.f32 %v394, %v373
    %v396 = vmul.f32 %v394, %v374
    %v397 = vadd.f32 %v346, %v395
    %v398 = vadd.f32 %v347, %v396
    %s399 = sld [smem:[#allocation6 + $0x36]]
    %v400 = vstv %s399
    %v401 = vmul.f32 %v400, %v373
    %v402 = vmul.f32 %v400, %v374
    %v403 = vadd.f32 %v352, %v401
    %v404 = vadd.f32 %v353, %v402
    %s405 = sld [smem:[#allocation6 + $0x42]]
    %v406 = vstv %s405
    %v407 = vmul.f32 %v406, %v373
    %v408 = vmul.f32 %v406, %v374
    %v409 = vadd.f32 %v358, %v407
    %v410 = vadd.f32 %v359, %v408
    %s411 = sld [smem:[#allocation6 + $0x4e]]
    %v412 = vstv %s411
    %v413 = vmul.f32 %v412, %v373
    %v414 = vmul.f32 %v412, %v374
    %v415 = vadd.f32 %v364, %v413
    %v416 = vadd.f32 %v365, %v414
    %s417 = sld [smem:[#allocation6 + $0x5a]]
    %v418 = vstv %s417
    %v419 = vmul.f32 %v418, %v373
    %v420 = vmul.f32 %v418, %v374
    %v421 = vadd.f32 %v370, %v419
    %v422 = vadd.f32 %v371, %v420
    %v423 = vld [vmem:[%s372 + $0x1] sm:$0xff]
    %v424 = vld [vmem:[%s372 + $0x9] sm:$0x3f]
    %s425 = sld [smem:[#allocation6 + $0x7]]
    %v426 = vstv %s425
    %v427 = vmul.f32 %v426, %v423
    %v428 = vmul.f32 %v426, %v424
    %v429 = vadd.f32 %v379, %v427
    %v430 = vadd.f32 %v380, %v428
    %s431 = sld [smem:[#allocation6 + $0x13]]
    %v432 = vstv %s431
    %v433 = vmul.f32 %v432, %v423
    %v434 = vmul.f32 %v432, %v424
    %v435 = vadd.f32 %v385, %v433
    %v436 = vadd.f32 %v386, %v434
    %s437 = sld [smem:[#allocation6 + $0x1f]]
    %v438 = vstv %s437
    %v439 = vmul.f32 %v438, %v423
    %v440 = vmul.f32 %v438, %v424
    %v441 = vadd.f32 %v391, %v439
    %v442 = vadd.f32 %v392, %v440
    %s443 = sld [smem:[#allocation6 + $0x2b]]
    %v444 = vstv %s443
    %v445 = vmul.f32 %v444, %v423
    %v446 = vmul.f32 %v444, %v424
    %v447 = vadd.f32 %v397, %v445
    %v448 = vadd.f32 %v398, %v446
    %s449 = sld [smem:[#allocation6 + $0x37]]
    %v450 = vstv %s449
    %v451 = vmul.f32 %v450, %v423
    %v452 = vmul.f32 %v450, %v424
    %v453 = vadd.f32 %v403, %v451
    %v454 = vadd.f32 %v404, %v452
    %s455 = sld [smem:[#allocation6 + $0x43]]
    %v456 = vstv %s455
    %v457 = vmul.f32 %v456, %v423
    %v458 = vmul.f32 %v456, %v424
    %v459 = vadd.f32 %v409, %v457
    %v460 = vadd.f32 %v410, %v458
    %s461 = sld [smem:[#allocation6 + $0x4f]]
    %v462 = vstv %s461
    %v463 = vmul.f32 %v462, %v423
    %v464 = vmul.f32 %v462, %v424
    %v465 = vadd.f32 %v415, %v463
    %v466 = vadd.f32 %v416, %v464
    %s467 = sld [smem:[#allocation6 + $0x5b]]
    %v468 = vstv %s467
    %v469 = vmul.f32 %v468, %v423
    %v470 = vmul.f32 %v468, %v424
    %v471 = vadd.f32 %v421, %v469
    %v472 = vadd.f32 %v422, %v470
    %v473 = vld [vmem:[%s372 + $0x2] sm:$0xff]
    %v474 = vld [vmem:[%s372 + $0xa] sm:$0x3f]
    %s475 = sld [smem:[#allocation6 + $0x8]]
    %v476 = vstv %s475
    %v477 = vmul.f32 %v476, %v473
    %v478 = vmul.f32 %v476, %v474
    %v479 = vadd.f32 %v429, %v477
    %v480 = vadd.f32 %v430, %v478
    %s481 = sld [smem:[#allocation6 + $0x14]]
    %v482 = vstv %s481
    %v483 = vmul.f32 %v482, %v473
    %v484 = vmul.f32 %v482, %v474
    %v485 = vadd.f32 %v435, %v483
    %v486 = vadd.f32 %v436, %v484
    %s487 = sld [smem:[#allocation6 + $0x20]]
    %v488 = vstv %s487
    %v489 = vmul.f32 %v488, %v473
    %v490 = vmul.f32 %v488, %v474
    %v491 = vadd.f32 %v441, %v489
    %v492 = vadd.f32 %v442, %v490
    %s493 = sld [smem:[#allocation6 + $0x2c]]
    %v494 = vstv %s493
    %v495 = vmul.f32 %v494, %v473
    %v496 = vmul.f32 %v494, %v474
    %v497 = vadd.f32 %v447, %v495
    %v498 = vadd.f32 %v448, %v496
    %s499 = sld [smem:[#allocation6 + $0x38]]
    %v500 = vstv %s499
    %v501 = vmul.f32 %v500, %v473
    %v502 = vmul.f32 %v500, %v474
    %v503 = vadd.f32 %v453, %v501
    %v504 = vadd.f32 %v454, %v502
    %s505 = sld [smem:[#allocation6 + $0x44]]
    %v506 = vstv %s505
    %v507 = vmul.f32 %v506, %v473
    %v508 = vmul.f32 %v506, %v474
    %v509 = vadd.f32 %v459, %v507
    %v510 = vadd.f32 %v460, %v508
    %s511 = sld [smem:[#allocation6 + $0x50]]
    %v512 = vstv %s511
    %v513 = vmul.f32 %v512, %v473
    %v514 = vmul.f32 %v512, %v474
    %v515 = vadd.f32 %v465, %v513
    %v516 = vadd.f32 %v466, %v514
    %s517 = sld [smem:[#allocation6 + $0x5c]]
    %v518 = vstv %s517
    %v519 = vmul.f32 %v518, %v473
    %v520 = vmul.f32 %v518, %v474
    %v521 = vadd.f32 %v471, %v519
    %v522 = vadd.f32 %v472, %v520
    %s523 = scalar_lea.vmem [#allocation2], 48
    %v524 = vld [vmem:[%s523] sm:$0xff]
    %v525 = vld [vmem:[%s523 + $0x8] sm:$0x3f]
    %s526 = sld [smem:[#allocation6 + $0x9]]
    %v527 = vstv %s526
    %v528 = vmul.f32 %v527, %v524
    %v529 = vmul.f32 %v527, %v525
    %v530 = vadd.f32 %v479, %v528
    %v531 = vadd.f32 %v480, %v529
    %s532 = sld [smem:[#allocation6 + $0x15]]
    %v533 = vstv %s532
    %v534 = vmul.f32 %v533, %v524
    %v535 = vmul.f32 %v533, %v525
    %v536 = vadd.f32 %v485, %v534
    %v537 = vadd.f32 %v486, %v535
    %s538 = sld [smem:[#allocation6 + $0x21]]
    %v539 = vstv %s538
    %v540 = vmul.f32 %v539, %v524
    %v541 = vmul.f32 %v539, %v525
    %v542 = vadd.f32 %v491, %v540
    %v543 = vadd.f32 %v492, %v541
    %s544 = sld [smem:[#allocation6 + $0x2d]]
    %v545 = vstv %s544
    %v546 = vmul.f32 %v545, %v524
    %v547 = vmul.f32 %v545, %v525
    %v548 = vadd.f32 %v497, %v546
    %v549 = vadd.f32 %v498, %v547
    %s550 = sld [smem:[#allocation6 + $0x39]]
    %v551 = vstv %s550
    %v552 = vmul.f32 %v551, %v524
    %v553 = vmul.f32 %v551, %v525
    %v554 = vadd.f32 %v503, %v552
    %v555 = vadd.f32 %v504, %v553
    %s556 = sld [smem:[#allocation6 + $0x45]]
    %v557 = vstv %s556
    %v558 = vmul.f32 %v557, %v524
    %v559 = vmul.f32 %v557, %v525
    %v560 = vadd.f32 %v509, %v558
    %v561 = vadd.f32 %v510, %v559
    %s562 = sld [smem:[#allocation6 + $0x51]]
    %v563 = vstv %s562
    %v564 = vmul.f32 %v563, %v524
    %v565 = vmul.f32 %v563, %v525
    %v566 = vadd.f32 %v515, %v564
    %v567 = vadd.f32 %v516, %v565
    %s568 = sld [smem:[#allocation6 + $0x5d]]
    %v569 = vstv %s568
    %v570 = vmul.f32 %v569, %v524
    %v571 = vmul.f32 %v569, %v525
    %v572 = vadd.f32 %v521, %v570
    %v573 = vadd.f32 %v522, %v571
    %v574 = vld [vmem:[%s523 + $0x1] sm:$0xff]
    %v575 = vld [vmem:[%s523 + $0x9] sm:$0x3f]
    %s576 = sld [smem:[#allocation6 + $0xa]]
    %v577 = vstv %s576
    %v578 = vmul.f32 %v577, %v574
    %v579 = vmul.f32 %v577, %v575
    %v580 = vadd.f32 %v530, %v578
    %v581 = vadd.f32 %v531, %v579
    %s582 = sld [smem:[#allocation6 + $0x16]]
    %v583 = vstv %s582
    %v584 = vmul.f32 %v583, %v574
    %v585 = vmul.f32 %v583, %v575
    %v586 = vadd.f32 %v536, %v584
    %v587 = vadd.f32 %v537, %v585
    %s588 = sld [smem:[#allocation6 + $0x22]]
    %v589 = vstv %s588
    %v590 = vmul.f32 %v589, %v574
    %v591 = vmul.f32 %v589, %v575
    %v592 = vadd.f32 %v542, %v590
    %v593 = vadd.f32 %v543, %v591
    %s594 = sld [smem:[#allocation6 + $0x2e]]
    %v595 = vstv %s594
    %v596 = vmul.f32 %v595, %v574
    %v597 = vmul.f32 %v595, %v575
    %v598 = vadd.f32 %v548, %v596
    %v599 = vadd.f32 %v549, %v597
    %s600 = sld [smem:[#allocation6 + $0x3a]]
    %v601 = vstv %s600
    %v602 = vmul.f32 %v601, %v574
    %v603 = vmul.f32 %v601, %v575
    %v604 = vadd.f32 %v554, %v602
    %v605 = vadd.f32 %v555, %v603
    %s606 = sld [smem:[#allocation6 + $0x46]]
    %v607 = vstv %s606
    %v608 = vmul.f32 %v607, %v574
    %v609 = vmul.f32 %v607, %v575
    %v610 = vadd.f32 %v560, %v608
    %v611 = vadd.f32 %v561, %v609
    %s612 = sld [smem:[#allocation6 + $0x52]]
    %v613 = vstv %s612
    %v614 = vmul.f32 %v613, %v574
    %v615 = vmul.f32 %v613, %v575
    %v616 = vadd.f32 %v566, %v614
    %v617 = vadd.f32 %v567, %v615
    %s618 = sld [smem:[#allocation6 + $0x5e]]
    %v619 = vstv %s618
    %v620 = vmul.f32 %v619, %v574
    %v621 = vmul.f32 %v619, %v575
    %v622 = vadd.f32 %v572, %v620
    %v623 = vadd.f32 %v573, %v621
    %v624 = vld [vmem:[%s523 + $0x2] sm:$0xff]
    %v625 = vld [vmem:[%s523 + $0xa] sm:$0x3f]
    %s626 = sld [smem:[#allocation6 + $0xb]]
    %v627 = vstv %s626
    %v628 = vmul.f32 %v627, %v624
    %v629 = vmul.f32 %v627, %v625
    %v630 = vadd.f32 %v580, %v628
    %v631 = vadd.f32 %v581, %v629
    %s632 = sld [smem:[#allocation6 + $0x17]]
    %v633 = vstv %s632
    %v634 = vmul.f32 %v633, %v624
    %v635 = vmul.f32 %v633, %v625
    %v636 = vadd.f32 %v586, %v634
    %v637 = vadd.f32 %v587, %v635
    %s638 = sld [smem:[#allocation6 + $0x23]]
    %v639 = vstv %s638
    %v640 = vmul.f32 %v639, %v624
    %v641 = vmul.f32 %v639, %v625
    %v642 = vadd.f32 %v592, %v640
    %v643 = vadd.f32 %v593, %v641
    %s644 = sld [smem:[#allocation6 + $0x2f]]
    %v645 = vstv %s644
    %v646 = vmul.f32 %v645, %v624
    %v647 = vmul.f32 %v645, %v625
    %v648 = vadd.f32 %v598, %v646
    %v649 = vadd.f32 %v599, %v647
    %s650 = sld [smem:[#allocation6 + $0x3b]]
    %v651 = vstv %s650
    %v652 = vmul.f32 %v651, %v624
    %v653 = vmul.f32 %v651, %v625
    %v654 = vadd.f32 %v604, %v652
    %v655 = vadd.f32 %v605, %v653
    %s656 = sld [smem:[#allocation6 + $0x47]]
    %v657 = vstv %s656
    %v658 = vmul.f32 %v657, %v624
    %v659 = vmul.f32 %v657, %v625
    %v660 = vadd.f32 %v610, %v658
    %v661 = vadd.f32 %v611, %v659
    %s662 = sld [smem:[#allocation6 + $0x53]]
    %v663 = vstv %s662
    %v664 = vmul.f32 %v663, %v624
    %v665 = vmul.f32 %v663, %v625
    %v666 = vadd.f32 %v616, %v664
    %v667 = vadd.f32 %v617, %v665
    %s668 = sld [smem:[#allocation6 + $0x5f]]
    %v669 = vstv %s668
    %v670 = vmul.f32 %v669, %v624
    %v671 = vmul.f32 %v669, %v625
    %v672 = vadd.f32 %v622, %v670
    %v673 = vadd.f32 %v623, %v671
    %v674 = vtanh.pop %v630
    %v675 = vtanh.pop %v631
    %v676 = vmul.f32 %v654, 0.5
    %v677 = vmul.f32 %v655, 0.5
    %v678 = vtanh.pop %v676
    %v679 = vtanh.pop %v677
    %v680 = vmul.f32 %v678, 0.5
    %v681 = vmul.f32 %v679, 0.5
    %v682 = vadd.f32 %v680, 0.5
    %v683 = vadd.f32 %v681, 0.5
    %v684 = vmul.f32 %v674, %v682
    %v685 = vmul.f32 %v675, %v683
    %vm686 = vcmask 261120
    %687 = vst.msk [vmem:[%s3] sm:$0xff] %vm686, %v684
    %vm688 = vcmask 259072
    %689 = vst.msk [vmem:[%s3 + $0x8] sm:$0x3f] %vm688, %v685
    %v690 = vtanh.pop %v636
    %v691 = vtanh.pop %v637
    %v692 = vmul.f32 %v660, 0.5
    %v693 = vmul.f32 %v661, 0.5
    %v694 = vtanh.pop %v692
    %v695 = vtanh.pop %v693
    %v696 = vmul.f32 %v694, 0.5
    %v697 = vmul.f32 %v695, 0.5
    %v698 = vadd.f32 %v696, 0.5
    %v699 = vadd.f32 %v697, 0.5
    %v700 = vmul.f32 %v690, %v698
    %v701 = vmul.f32 %v691, %v699
    %s702 = scalar_lea.vmem %s3, 16
    %703 = vst.msk [vmem:[%s702] sm:$0xff] %vm686, %v700
    %704 = vst.msk [vmem:[%s702 + $0x8] sm:$0x3f] %vm688, %v701
    %v705 = vtanh.pop %v642
    %v706 = vtanh.pop %v643
    %v707 = vmul.f32 %v666, 0.5
    %v708 = vmul.f32 %v667, 0.5
    %v709 = vtanh.pop %v707
    %v710 = vtanh.pop %v708
    %v711 = vmul.f32 %v709, 0.5
    %v712 = vmul.f32 %v710, 0.5
    %v713 = vadd.f32 %v711, 0.5
    %v714 = vadd.f32 %v712, 0.5
    %v715 = vmul.f32 %v705, %v713
    %v716 = vmul.f32 %v706, %v714
    %s717 = scalar_lea.vmem %s3, 32
    %718 = vst.msk [vmem:[%s717] sm:$0xff] %vm686, %v715
    %719 = vst.msk [vmem:[%s717 + $0x8] sm:$0x3f] %vm688, %v716
    %v720 = vtanh.pop %v648
    %v721 = vtanh.pop %v649
    %v722 = vmul.f32 %v672, 0.5
    %v723 = vmul.f32 %v673, 0.5
    %v724 = vtanh.pop %v722
    %v725 = vtanh.pop %v723
    %v726 = vmul.f32 %v724, 0.5
    %v727 = vmul.f32 %v725, 0.5
    %v728 = vadd.f32 %v726, 0.5
    %v729 = vadd.f32 %v727, 0.5
    %v730 = vmul.f32 %v720, %v728
    %v731 = vmul.f32 %v721, %v729
    %s732 = scalar_lea.vmem %s3, 48
    %733 = vst.msk [vmem:[%s732] sm:$0xff] %vm686, %v730
    %734 = vst.msk [vmem:[%s732 + $0x8] sm:$0x3f] %vm688, %v731
    // Predicated region
    $region26: #{tpu_custom_call.1} parent=1 // pred_check
      _
    $region27: #{tpu_custom_call.1} parent=1 // pred_check_branch
      %736 = sbr.rel (0) target = $region29
    $region28: #{tpu_custom_call.1} parent=1 // pred_region
      _
    $region29: #{tpu_custom_call.1} parent=1 // pred_fallthru
      _
    // Predicated region
    $region30: #{tpu_custom_call.1} parent=1 // pred_check
      _
    $region31: #{tpu_custom_call.1} parent=1 // pred_check_branch
      %738 = sbr.rel (0) target = $region33
    $region32: #{tpu_custom_call.1} parent=1 // pred_region
      _
    $region33: #{tpu_custom_call.1} parent=1 // pred_fallthru
      _
    %739 = vsyncpa [#allocation3], 1
    %740 = vsyncpa [#allocation4], 1
    %741 = vsyncpa [#allocation5], 1

</llo_original>
